<compile_context>
chip_gen: v5e
topology: v5e:2x2
jax: 0.10.0
libtpu: 0.0.40
codegen_flags: <defaults>
</compile_context>

<pallas_src>
import jax
import jax.numpy as jnp
from jax import lax
from jax.experimental import pallas as pl
from jax.experimental.pallas import tpu as pltpu

BBLK = 8  # sublane block of batch rows handled per grid step (one (8,128)-aligned row group)


def lstm_kernel(x_ref, wih_ref, whh_ref, b_ref, hs_ref, g_sc, h_sc, c_sc):
    """One (batch-block, time-chunk) grid step.

    x_ref  : (Tc*8, F)   input chunk, rows = (t, sublane) within this batch block
    wih_ref: (F, 4H)     W_ih^T          (VMEM-resident across the whole grid)
    whh_ref: (H, 4H)     W_hh^T          (VMEM-resident across the whole grid)
    b_ref  : (1, 4H)     b_ih + b_hh     (VMEM-resident across the whole grid)
    hs_ref : (Tc*8, H)   output hidden states for this chunk (lane-dense, H lanes)
    g_sc   : (Tc*8, 4H)  per-chunk input-side gate pre-activations
    h_sc   : (8, H)      h state, carried across time chunks via scratch
    c_sc   : (8, H)      c state, carried across time chunks via scratch
    """
    H = whh_ref.shape[0]
    n_rows = h_sc.shape[0]                 # 8
    Tc = g_sc.shape[0] // n_rows           # timesteps in this chunk

    # Hoisted input projection: one MXU matmul for the whole chunk.
    g_sc[...] = (jnp.dot(x_ref[...], wih_ref[...], preferred_element_type=jnp.float32)
                 + b_ref[...])

    # Zero (h0, c0) at the first time chunk of each batch block (PyTorch default hx).
    @pl.when(pl.program_id(1) == 0)
    def _():
        h_sc[...] = jnp.zeros_like(h_sc)
        c_sc[...] = jnp.zeros_like(c_sc)

    # Loop-invariant lane constants, hoisted out of the recurrence (JAX does not CSE
    # broadcast_in_dim). Single-tanh activation: sigmoid(x) = 0.5*tanh(0.5*x) + 0.5, so
    # act = s*tanh(s*gates) + t with s=0.5,t=0.5 on i/f/o lanes and s=1,t=0 on g lanes.
    lane = lax.broadcasted_iota(jnp.int32, (n_rows, 4 * H), 1)
    is_g = (lane >= 2 * H) & (lane < 3 * H)
    s_vec = jnp.where(is_g, 1.0, 0.5).astype(jnp.float32)
    t_vec = jnp.where(is_g, 0.0, 0.5).astype(jnp.float32)

    def step(t, carry):
        row = pl.multiple_of(t * n_rows, n_rows)          # sublane-aligned row offset
        gates = (g_sc[pl.ds(row, n_rows), :]
                 + jnp.dot(h_sc[...], whh_ref[...], preferred_element_type=jnp.float32))

        act = s_vec * jnp.tanh(s_vec * gates) + t_vec     # one EUP pass over all 4H lanes

        i_g = act[:, 0 * H:1 * H]
        f_g = act[:, 1 * H:2 * H]
        g_g = act[:, 2 * H:3 * H]
        o_g = act[:, 3 * H:4 * H]

        c_new = f_g * c_sc[...] + i_g * g_g
        h_new = o_g * jnp.tanh(c_new)

        c_sc[...] = c_new
        h_sc[...] = h_new
        hs_ref[pl.ds(row, n_rows), :] = h_new
        return carry

    # Bounded unroll: chunk length is small and the recurrence is serial anyway.
    lax.fori_loop(0, Tc, step, 0, unroll=min(Tc, 8))


def lstm_forward(x, w_ih, w_hh, b_ih, b_hh, w_pred, b_pred, *, time_chunk=4):
    """x: (T, B, F). w_ih: (4H, F), w_hh: (4H, H), biases: (4H,), w_pred: (O, H), b_pred: (O,)."""
    T, B, F_ = x.shape
    H = w_hh.shape[1]

    Bp = ((B + BBLK - 1) // BBLK) * BBLK
    nb = Bp // BBLK
    Tc = max(1, min(time_chunk, T))
    Tp = ((T + Tc - 1) // Tc) * Tc
    nt = Tp // Tc

    xf = jnp.asarray(x, jnp.float32)
    xp = jnp.pad(xf, ((0, Tp - T), (0, Bp - B), (0, 0)))                     # (Tp, Bp, F)
    # (Tp, Bp, F) -> (nb, Tp*8, F): batch blocks outermost, (time, sublane) rows inside,
    # so each grid step sees a contiguous (Tc*8, F) slab.
    x_nb = xp.reshape(Tp, nb, BBLK, F_).transpose(1, 0, 2, 3).reshape(nb, Tp * BBLK, F_)

    wih_t = jnp.asarray(w_ih, jnp.float32).T          # (F, 4H)
    whh_t = jnp.asarray(w_hh, jnp.float32).T          # (H, 4H)
    bias = (jnp.asarray(b_ih, jnp.float32) + jnp.asarray(b_hh, jnp.float32))[None, :]  # (1,4H)

    hs_nb = pl.pallas_call(
        lstm_kernel,
        out_shape=jax.ShapeDtypeStruct((nb, Tp * BBLK, H), jnp.float32),
        grid=(nb, nt),
        in_specs=[
            pl.BlockSpec((None, Tc * BBLK, F_), lambda b, c: (b, c, 0)),   # x chunk
            pl.BlockSpec((F_, 4 * H), lambda b, c: (0, 0)),                # W_ih^T (constant block)
            pl.BlockSpec((H, 4 * H), lambda b, c: (0, 0)),                 # W_hh^T (constant block)
            pl.BlockSpec((1, 4 * H), lambda b, c: (0, 0)),                 # bias   (constant block)
        ],
        out_specs=pl.BlockSpec((None, Tc * BBLK, H), lambda b, c: (b, c, 0)),
        scratch_shapes=[
            pltpu.VMEM((Tc * BBLK, 4 * H), jnp.float32),   # per-chunk input-side gates
            pltpu.VMEM((BBLK, H), jnp.float32),            # h state (carried across chunks)
            pltpu.VMEM((BBLK, H), jnp.float32),            # c state (carried across chunks)
        ],
        compiler_params=pltpu.CompilerParams(
            dimension_semantics=("parallel", "arbitrary"),  # batch-parallel (v7x 2 TCs), time serial
            vmem_limit_bytes=32 * 1024 * 1024,
        ),
    )(x_nb, wih_t, whh_t, bias)

    # (nb, Tp*8, H) -> (Tp, Bp, H) -> (T, B, H)
    hs = hs_nb.reshape(nb, Tp, BBLK, H).transpose(1, 0, 2, 3).reshape(Tp, Bp, H)[:T, :B, :]

    # Final Linear (O=1) deliberately done in XLA: keeps the kernel output store lane-dense
    # (H lanes instead of 1) and this tiny projection fuses into the consumer.
    y = hs @ jnp.asarray(w_pred, jnp.float32).T + jnp.asarray(b_pred, jnp.float32)
    return y.astype(x.dtype)


def lstm_reference(x, w_ih, w_hh, b_ih, b_hh, w_pred, b_pred):
    """Pure-JAX reference matching torch.nn.LSTM + Linear semantics."""
    T, B, F_ = x.shape
    H = w_hh.shape[1]
    b = b_ih + b_hh

    def step(carry, x_t):
        h, c = carry
        gates = x_t @ w_ih.T + h @ w_hh.T + b
        i_g = jax.nn.sigmoid(gates[:, 0 * H:1 * H])
        f_g = jax.nn.sigmoid(gates[:, 1 * H:2 * H])
        g_g = jnp.tanh(gates[:, 2 * H:3 * H])
        o_g = jax.nn.sigmoid(gates[:, 3 * H:4 * H])
        c_new = f_g * c + i_g * g_g
        h_new = o_g * jnp.tanh(c_new)
        return (h_new, c_new), h_new

    init = (jnp.zeros((B, H), jnp.float32), jnp.zeros((B, H), jnp.float32))
    _, hs = lax.scan(step, init, x)                 # (T, B, H)
    return hs @ w_pred.T + b_pred


if __name__ == "__main__":
    # Small shapes consistent with the module: LSTM(n_feature=8, n_hidden=32, n_output=1).
    # T=10, B=12 exercise time-chunking (Tc=4 -> padded to 12), time/batch padding and
    # two batch blocks (parallel grid axis), with state carried across chunks.
    T, B, F_, H, O = 10, 12, 8, 32, 1

    key = jax.random.PRNGKey(0)
    ks = jax.random.split(key, 7)
    scale = 1.0 / jnp.sqrt(jnp.float32(H))   # PyTorch default init range

    w_ih = jax.random.uniform(ks[0], (4 * H, F_), jnp.float32, -scale, scale)
    w_hh = jax.random.uniform(ks[1], (4 * H, H), jnp.float32, -scale, scale)
    b_ih = jax.random.uniform(ks[2], (4 * H,), jnp.float32, -scale, scale)
    b_hh = jax.random.uniform(ks[3], (4 * H,), jnp.float32, -scale, scale)
    w_pred = jax.random.uniform(ks[4], (O, H), jnp.float32, -scale, scale)
    b_pred = jax.random.uniform(ks[5], (O,), jnp.float32, -scale, scale)

    x = jax.random.normal(ks[6], (T, B, F_), jnp.float32)

    y = lstm_forward(x, w_ih, w_hh, b_ih, b_hh, w_pred, b_pred)
    y = jax.block_until_ready(y)

    y_ref = lstm_reference(x, w_ih, w_hh, b_ih, b_hh, w_pred, b_pred)
    assert y.shape == (T, B, O)
    assert jnp.allclose(y, y_ref, atol=1e-5, rtol=1e-5), "mismatch vs pure-JAX reference"

    print("KERNEL_OK")
</pallas_src>

<mosaic_0001>
module attributes {stable_mosaic.version = 11 : i64} {
  func.func @lstm_kernel(%arg0: i32, %arg1: i32, %arg2: memref<1x32x8xf32, #tpu.memory_space<vmem>>, %arg3: memref<8x128xf32, #tpu.memory_space<vmem>>, %arg4: memref<32x128xf32, #tpu.memory_space<vmem>>, %arg5: memref<1x128xf32, #tpu.memory_space<vmem>>, %arg6: memref<1x32x32xf32, #tpu.memory_space<vmem>>, %arg7: memref<32x128xf32, #tpu.memory_space<vmem>>, %arg8: memref<8x32xf32, #tpu.memory_space<vmem>>, %arg9: memref<8x32xf32, #tpu.memory_space<vmem>>) attributes {dimension_semantics = [#tpu.dimension_semantics<parallel>, #tpu.dimension_semantics<arbitrary>], iteration_bounds = array<i64: 2, 3>, scalar_prefetch = 0 : i64, scratch_operands = 3 : i64, tpu.core_type = #tpu.core_type<tc>, window_params = [{transform_indices = @transform_0, window_bounds = array<i64: 1, 32, 8>}, {pipeline_mode = #tpu.pipeline_mode<synchronous>, transform_indices = @transform_1, window_bounds = array<i64: 8, 128>}, {pipeline_mode = #tpu.pipeline_mode<synchronous>, transform_indices = @transform_2, window_bounds = array<i64: 32, 128>}, {pipeline_mode = #tpu.pipeline_mode<synchronous>, transform_indices = @transform_3, window_bounds = array<i64: 1, 128>}, {transform_indices = @transform_4, window_bounds = array<i64: 1, 32, 32>}]} {
    %c0 = arith.constant 0 : index
    %c0_0 = arith.constant 0 : index
    %c0_1 = arith.constant 0 : index
    %0 = vector.load %arg2[%c0, %c0_0, %c0_1] : memref<1x32x8xf32, #tpu.memory_space<vmem>>, vector<1x32x8xf32>
    %1 = vector.shape_cast %0 : vector<1x32x8xf32> to vector<32x8xf32>
    %c0_2 = arith.constant 0 : index
    %c0_3 = arith.constant 0 : index
    %2 = vector.load %arg3[%c0_2, %c0_3] : memref<8x128xf32, #tpu.memory_space<vmem>>, vector<8x128xf32>
    %cst = arith.constant dense<0.000000e+00> : vector<32x128xf32>
    %3 = tpu.matmul %1, %2, %cst {dimension_numbers = #tpu.dot_dimension_numbers<[1], [0], [0], [1], [0, 0, 1, 1], [], []>} : vector<32x8xf32>, vector<8x128xf32>, vector<32x128xf32> -> vector<32x128xf32>
    %c0_4 = arith.constant 0 : index
    %c0_5 = arith.constant 0 : index
    %4 = vector.load %arg5[%c0_4, %c0_5] : memref<1x128xf32, #tpu.memory_space<vmem>>, vector<1x128xf32>
    %5 = vector.broadcast %4 : vector<1x128xf32> to vector<32x128xf32>
    %6 = arith.addf %3, %5 : vector<32x128xf32>
    %c0_6 = arith.constant 0 : index
    %c0_7 = arith.constant 0 : index
    %7 = vector.load %arg7[%c0_6, %c0_7] : memref<32x128xf32, #tpu.memory_space<vmem>>, vector<32x128xf32>
    tpu.vector_store %arg7[%c0_6, %c0_7], %6 {strides = array<i32>} : memref<32x128xf32, #tpu.memory_space<vmem>>, vector<32x128xf32>,
    %c0_i32 = arith.constant 0 : i32
    %8 = arith.cmpi eq, %arg1, %c0_i32 : i32
    %9 = arith.extui %8 : i1 to i32
    %c0_i32_8 = arith.constant 0 : i32
    %10 = arith.cmpi ne, %9, %c0_i32_8 : i32
    scf.if %10 {
      %cst_73 = arith.constant 0.000000e+00 : f32
      %135 = vector.broadcast %cst_73 : f32 to vector<8x32xf32>
      %c0_74 = arith.constant 0 : index
      %c0_75 = arith.constant 0 : index
      %136 = vector.load %arg8[%c0_74, %c0_75] : memref<8x32xf32, #tpu.memory_space<vmem>>, vector<8x32xf32>
      tpu.vector_store %arg8[%c0_74, %c0_75], %135 {strides = array<i32>} : memref<8x32xf32, #tpu.memory_space<vmem>>, vector<8x32xf32>,
      %cst_76 = arith.constant 0.000000e+00 : f32
      %137 = vector.broadcast %cst_76 : f32 to vector<8x32xf32>
      %c0_77 = arith.constant 0 : index
      %c0_78 = arith.constant 0 : index
      %138 = vector.load %arg9[%c0_77, %c0_78] : memref<8x32xf32, #tpu.memory_space<vmem>>, vector<8x32xf32>
      tpu.vector_store %arg9[%c0_77, %c0_78], %137 {strides = array<i32>} : memref<8x32xf32, #tpu.memory_space<vmem>>, vector<8x32xf32>,
    } else {
    }
    %11 = tpu.iota {dimensions = array<i32: 1>} : vector<8x128xi32>
    %c64_i32 = arith.constant 64 : i32
    %12 = vector.broadcast %c64_i32 : i32 to vector<8x128xi32>
    %13 = arith.cmpi sge, %11, %12 : vector<8x128xi32>
    %c96_i32 = arith.constant 96 : i32
    %14 = vector.broadcast %c96_i32 : i32 to vector<8x128xi32>
    %15 = arith.cmpi slt, %11, %14 : vector<8x128xi32>
    %16 = arith.andi %13, %15 : vector<8x128xi1>
    %cst_9 = arith.constant 1.000000e+00 : f32
    %cst_10 = arith.constant 5.000000e-01 : f32
    %17 = vector.broadcast %cst_9 : f32 to vector<8x128xf32>
    %18 = vector.broadcast %cst_10 : f32 to vector<8x128xf32>
    %19 = arith.select %16, %17, %18 : vector<8x128xi1>, vector<8x128xf32>
    %cst_11 = arith.constant 0.000000e+00 : f32
    %cst_12 = arith.constant 5.000000e-01 : f32
    %20 = vector.broadcast %cst_11 : f32 to vector<8x128xf32>
    %21 = vector.broadcast %cst_12 : f32 to vector<8x128xf32>
    %22 = arith.select %16, %20, %21 : vector<8x128xi1>, vector<8x128xf32>
    %c0_i32_13 = arith.constant 0 : i32
    %c8_i32 = arith.constant 8 : i32
    %23 = arith.muli %c0_i32_13, %c8_i32 : i32
    %24 = tpu.assume_multiple %23, 8 : i32
    %25 = arith.index_cast %24 : i32 to index
    %c0_14 = arith.constant 0 : index
    %26 = vector.load %arg7[%25, %c0_14] : memref<32x128xf32, #tpu.memory_space<vmem>>, vector<8x128xf32>
    %c0_15 = arith.constant 0 : index
    %c0_16 = arith.constant 0 : index
    %27 = vector.load %arg8[%c0_15, %c0_16] : memref<8x32xf32, #tpu.memory_space<vmem>>, vector<8x32xf32>
    %c0_17 = arith.constant 0 : index
    %c0_18 = arith.constant 0 : index
    %28 = vector.load %arg4[%c0_17, %c0_18] : memref<32x128xf32, #tpu.memory_space<vmem>>, vector<32x128xf32>
    %cst_19 = arith.constant dense<0.000000e+00> : vector<8x128xf32>
    %29 = tpu.matmul %27, %28, %cst_19 {dimension_numbers = #tpu.dot_dimension_numbers<[1], [0], [0], [1], [0, 0, 1, 1], [], []>} : vector<8x32xf32>, vector<32x128xf32>, vector<8x128xf32> -> vector<8x128xf32>
    %30 = arith.addf %26, %29 : vector<8x128xf32>
    %31 = arith.mulf %19, %30 : vector<8x128xf32>
    %32 = math.tanh %31 : vector<8x128xf32>
    %33 = arith.mulf %19, %32 : vector<8x128xf32>
    %34 = arith.addf %33, %22 : vector<8x128xf32>
    %35 = vector.extract_strided_slice %34 {offsets = [0, 0], sizes = [8, 32], strides = [1, 1]} : vector<8x128xf32> to vector<8x32xf32>
    %36 = vector.extract_strided_slice %34 {offsets = [0, 32], sizes = [8, 32], strides = [1, 1]} : vector<8x128xf32> to vector<8x32xf32>
    %37 = vector.extract_strided_slice %34 {offsets = [0, 64], sizes = [8, 32], strides = [1, 1]} : vector<8x128xf32> to vector<8x32xf32>
    %38 = vector.extract_strided_slice %34 {offsets = [0, 96], sizes = [8, 32], strides = [1, 1]} : vector<8x128xf32> to vector<8x32xf32>
    %c0_20 = arith.constant 0 : index
    %c0_21 = arith.constant 0 : index
    %39 = vector.load %arg9[%c0_20, %c0_21] : memref<8x32xf32, #tpu.memory_space<vmem>>, vector<8x32xf32>
    %40 = arith.mulf %36, %39 : vector<8x32xf32>
    %41 = arith.mulf %35, %37 : vector<8x32xf32>
    %42 = arith.addf %40, %41 : vector<8x32xf32>
    %43 = math.tanh %42 : vector<8x32xf32>
    %44 = arith.mulf %38, %43 : vector<8x32xf32>
    %c0_22 = arith.constant 0 : index
    %c0_23 = arith.constant 0 : index
    %45 = vector.load %arg9[%c0_22, %c0_23] : memref<8x32xf32, #tpu.memory_space<vmem>>, vector<8x32xf32>
    tpu.vector_store %arg9[%c0_22, %c0_23], %42 {strides = array<i32>} : memref<8x32xf32, #tpu.memory_space<vmem>>, vector<8x32xf32>,
    %c0_24 = arith.constant 0 : index
    %c0_25 = arith.constant 0 : index
    %46 = vector.load %arg8[%c0_24, %c0_25] : memref<8x32xf32, #tpu.memory_space<vmem>>, vector<8x32xf32>
    tpu.vector_store %arg8[%c0_24, %c0_25], %44 {strides = array<i32>} : memref<8x32xf32, #tpu.memory_space<vmem>>, vector<8x32xf32>,
    %c0_26 = arith.constant 0 : index
    %47 = arith.index_cast %24 : i32 to index
    %c0_27 = arith.constant 0 : index
    %48 = vector.load %arg6[%c0_26, %47, %c0_27] : memref<1x32x32xf32, #tpu.memory_space<vmem>>, vector<1x8x32xf32>
    %49 = vector.shape_cast %48 : vector<1x8x32xf32> to vector<8x32xf32>
    %50 = vector.shape_cast %44 : vector<8x32xf32> to vector<1x8x32xf32>
    tpu.vector_store %arg6[%c0_26, %47, %c0_27], %50 {strides = array<i32>} : memref<1x32x32xf32, #tpu.memory_space<vmem>>, vector<1x8x32xf32>,
    %c1_i32 = arith.constant 1 : i32
    %c8_i32_28 = arith.constant 8 : i32
    %51 = arith.muli %c1_i32, %c8_i32_28 : i32
    %52 = tpu.assume_multiple %51, 8 : i32
    %53 = arith.index_cast %52 : i32 to index
    %c0_29 = arith.constant 0 : index
    %54 = vector.load %arg7[%53, %c0_29] : memref<32x128xf32, #tpu.memory_space<vmem>>, vector<8x128xf32>
    %c0_30 = arith.constant 0 : index
    %c0_31 = arith.constant 0 : index
    %55 = vector.load %arg8[%c0_30, %c0_31] : memref<8x32xf32, #tpu.memory_space<vmem>>, vector<8x32xf32>
    %c0_32 = arith.constant 0 : index
    %c0_33 = arith.constant 0 : index
    %56 = vector.load %arg4[%c0_32, %c0_33] : memref<32x128xf32, #tpu.memory_space<vmem>>, vector<32x128xf32>
    %cst_34 = arith.constant dense<0.000000e+00> : vector<8x128xf32>
    %57 = tpu.matmul %55, %56, %cst_34 {dimension_numbers = #tpu.dot_dimension_numbers<[1], [0], [0], [1], [0, 0, 1, 1], [], []>} : vector<8x32xf32>, vector<32x128xf32>, vector<8x128xf32> -> vector<8x128xf32>
    %58 = arith.addf %54, %57 : vector<8x128xf32>
    %59 = arith.mulf %19, %58 : vector<8x128xf32>
    %60 = math.tanh %59 : vector<8x128xf32>
    %61 = arith.mulf %19, %60 : vector<8x128xf32>
    %62 = arith.addf %61, %22 : vector<8x128xf32>
    %63 = vector.extract_strided_slice %62 {offsets = [0, 0], sizes = [8, 32], strides = [1, 1]} : vector<8x128xf32> to vector<8x32xf32>
    %64 = vector.extract_strided_slice %62 {offsets = [0, 32], sizes = [8, 32], strides = [1, 1]} : vector<8x128xf32> to vector<8x32xf32>
    %65 = vector.extract_strided_slice %62 {offsets = [0, 64], sizes = [8, 32], strides = [1, 1]} : vector<8x128xf32> to vector<8x32xf32>
    %66 = vector.extract_strided_slice %62 {offsets = [0, 96], sizes = [8, 32], strides = [1, 1]} : vector<8x128xf32> to vector<8x32xf32>
    %c0_35 = arith.constant 0 : index
    %c0_36 = arith.constant 0 : index
    %67 = vector.load %arg9[%c0_35, %c0_36] : memref<8x32xf32, #tpu.memory_space<vmem>>, vector<8x32xf32>
    %68 = arith.mulf %64, %67 : vector<8x32xf32>
    %69 = arith.mulf %63, %65 : vector<8x32xf32>
    %70 = arith.addf %68, %69 : vector<8x32xf32>
    %71 = math.tanh %70 : vector<8x32xf32>
    %72 = arith.mulf %66, %71 : vector<8x32xf32>
    %c0_37 = arith.constant 0 : index
    %c0_38 = arith.constant 0 : index
    %73 = vector.load %arg9[%c0_37, %c0_38] : memref<8x32xf32, #tpu.memory_space<vmem>>, vector<8x32xf32>
    tpu.vector_store %arg9[%c0_37, %c0_38], %70 {strides = array<i32>} : memref<8x32xf32, #tpu.memory_space<vmem>>, vector<8x32xf32>,
    %c0_39 = arith.constant 0 : index
    %c0_40 = arith.constant 0 : index
    %74 = vector.load %arg8[%c0_39, %c0_40] : memref<8x32xf32, #tpu.memory_space<vmem>>, vector<8x32xf32>
    tpu.vector_store %arg8[%c0_39, %c0_40], %72 {strides = array<i32>} : memref<8x32xf32, #tpu.memory_space<vmem>>, vector<8x32xf32>,
    %c0_41 = arith.constant 0 : index
    %75 = arith.index_cast %52 : i32 to index
    %c0_42 = arith.constant 0 : index
    %76 = vector.load %arg6[%c0_41, %75, %c0_42] : memref<1x32x32xf32, #tpu.memory_space<vmem>>, vector<1x8x32xf32>
    %77 = vector.shape_cast %76 : vector<1x8x32xf32> to vector<8x32xf32>
    %78 = vector.shape_cast %72 : vector<8x32xf32> to vector<1x8x32xf32>
    tpu.vector_store %arg6[%c0_41, %75, %c0_42], %78 {strides = array<i32>} : memref<1x32x32xf32, #tpu.memory_space<vmem>>, vector<1x8x32xf32>,
    %c2_i32 = arith.constant 2 : i32
    %c8_i32_43 = arith.constant 8 : i32
    %79 = arith.muli %c2_i32, %c8_i32_43 : i32
    %80 = tpu.assume_multiple %79, 8 : i32
    %81 = arith.index_cast %80 : i32 to index
    %c0_44 = arith.constant 0 : index
    %82 = vector.load %arg7[%81, %c0_44] : memref<32x128xf32, #tpu.memory_space<vmem>>, vector<8x128xf32>
    %c0_45 = arith.constant 0 : index
    %c0_46 = arith.constant 0 : index
    %83 = vector.load %arg8[%c0_45, %c0_46] : memref<8x32xf32, #tpu.memory_space<vmem>>, vector<8x32xf32>
    %c0_47 = arith.constant 0 : index
    %c0_48 = arith.constant 0 : index
    %84 = vector.load %arg4[%c0_47, %c0_48] : memref<32x128xf32, #tpu.memory_space<vmem>>, vector<32x128xf32>
    %cst_49 = arith.constant dense<0.000000e+00> : vector<8x128xf32>
    %85 = tpu.matmul %83, %84, %cst_49 {dimension_numbers = #tpu.dot_dimension_numbers<[1], [0], [0], [1], [0, 0, 1, 1], [], []>} : vector<8x32xf32>, vector<32x128xf32>, vector<8x128xf32> -> vector<8x128xf32>
    %86 = arith.addf %82, %85 : vector<8x128xf32>
    %87 = arith.mulf %19, %86 : vector<8x128xf32>
    %88 = math.tanh %87 : vector<8x128xf32>
    %89 = arith.mulf %19, %88 : vector<8x128xf32>
    %90 = arith.addf %89, %22 : vector<8x128xf32>
    %91 = vector.extract_strided_slice %90 {offsets = [0, 0], sizes = [8, 32], strides = [1, 1]} : vector<8x128xf32> to vector<8x32xf32>
    %92 = vector.extract_strided_slice %90 {offsets = [0, 32], sizes = [8, 32], strides = [1, 1]} : vector<8x128xf32> to vector<8x32xf32>
    %93 = vector.extract_strided_slice %90 {offsets = [0, 64], sizes = [8, 32], strides = [1, 1]} : vector<8x128xf32> to vector<8x32xf32>
    %94 = vector.extract_strided_slice %90 {offsets = [0, 96], sizes = [8, 32], strides = [1, 1]} : vector<8x128xf32> to vector<8x32xf32>
    %c0_50 = arith.constant 0 : index
    %c0_51 = arith.constant 0 : index
    %95 = vector.load %arg9[%c0_50, %c0_51] : memref<8x32xf32, #tpu.memory_space<vmem>>, vector<8x32xf32>
    %96 = arith.mulf %92, %95 : vector<8x32xf32>
    %97 = arith.mulf %91, %93 : vector<8x32xf32>
    %98 = arith.addf %96, %97 : vector<8x32xf32>
    %99 = math.tanh %98 : vector<8x32xf32>
    %100 = arith.mulf %94, %99 : vector<8x32xf32>
    %c0_52 = arith.constant 0 : index
    %c0_53 = arith.constant 0 : index
    %101 = vector.load %arg9[%c0_52, %c0_53] : memref<8x32xf32, #tpu.memory_space<vmem>>, vector<8x32xf32>
    tpu.vector_store %arg9[%c0_52, %c0_53], %98 {strides = array<i32>} : memref<8x32xf32, #tpu.memory_space<vmem>>, vector<8x32xf32>,
    %c0_54 = arith.constant 0 : index
    %c0_55 = arith.constant 0 : index
    %102 = vector.load %arg8[%c0_54, %c0_55] : memref<8x32xf32, #tpu.memory_space<vmem>>, vector<8x32xf32>
    tpu.vector_store %arg8[%c0_54, %c0_55], %100 {strides = array<i32>} : memref<8x32xf32, #tpu.memory_space<vmem>>, vector<8x32xf32>,
    %c0_56 = arith.constant 0 : index
    %103 = arith.index_cast %80 : i32 to index
    %c0_57 = arith.constant 0 : index
    %104 = vector.load %arg6[%c0_56, %103, %c0_57] : memref<1x32x32xf32, #tpu.memory_space<vmem>>, vector<1x8x32xf32>
    %105 = vector.shape_cast %104 : vector<1x8x32xf32> to vector<8x32xf32>
    %106 = vector.shape_cast %100 : vector<8x32xf32> to vector<1x8x32xf32>
    tpu.vector_store %arg6[%c0_56, %103, %c0_57], %106 {strides = array<i32>} : memref<1x32x32xf32, #tpu.memory_space<vmem>>, vector<1x8x32xf32>,
    %c3_i32 = arith.constant 3 : i32
    %c8_i32_58 = arith.constant 8 : i32
    %107 = arith.muli %c3_i32, %c8_i32_58 : i32
    %108 = tpu.assume_multiple %107, 8 : i32
    %109 = arith.index_cast %108 : i32 to index
    %c0_59 = arith.constant 0 : index
    %110 = vector.load %arg7[%109, %c0_59] : memref<32x128xf32, #tpu.memory_space<vmem>>, vector<8x128xf32>
    %c0_60 = arith.constant 0 : index
    %c0_61 = arith.constant 0 : index
    %111 = vector.load %arg8[%c0_60, %c0_61] : memref<8x32xf32, #tpu.memory_space<vmem>>, vector<8x32xf32>
    %c0_62 = arith.constant 0 : index
    %c0_63 = arith.constant 0 : index
    %112 = vector.load %arg4[%c0_62, %c0_63] : memref<32x128xf32, #tpu.memory_space<vmem>>, vector<32x128xf32>
    %cst_64 = arith.constant dense<0.000000e+00> : vector<8x128xf32>
    %113 = tpu.matmul %111, %112, %cst_64 {dimension_numbers = #tpu.dot_dimension_numbers<[1], [0], [0], [1], [0, 0, 1, 1], [], []>} : vector<8x32xf32>, vector<32x128xf32>, vector<8x128xf32> -> vector<8x128xf32>
    %114 = arith.addf %110, %113 : vector<8x128xf32>
    %115 = arith.mulf %19, %114 : vector<8x128xf32>
    %116 = math.tanh %115 : vector<8x128xf32>
    %117 = arith.mulf %19, %116 : vector<8x128xf32>
    %118 = arith.addf %117, %22 : vector<8x128xf32>
    %119 = vector.extract_strided_slice %118 {offsets = [0, 0], sizes = [8, 32], strides = [1, 1]} : vector<8x128xf32> to vector<8x32xf32>
    %120 = vector.extract_strided_slice %118 {offsets = [0, 32], sizes = [8, 32], strides = [1, 1]} : vector<8x128xf32> to vector<8x32xf32>
    %121 = vector.extract_strided_slice %118 {offsets = [0, 64], sizes = [8, 32], strides = [1, 1]} : vector<8x128xf32> to vector<8x32xf32>
    %122 = vector.extract_strided_slice %118 {offsets = [0, 96], sizes = [8, 32], strides = [1, 1]} : vector<8x128xf32> to vector<8x32xf32>
    %c0_65 = arith.constant 0 : index
    %c0_66 = arith.constant 0 : index
    %123 = vector.load %arg9[%c0_65, %c0_66] : memref<8x32xf32, #tpu.memory_space<vmem>>, vector<8x32xf32>
    %124 = arith.mulf %120, %123 : vector<8x32xf32>
    %125 = arith.mulf %119, %121 : vector<8x32xf32>
    %126 = arith.addf %124, %125 : vector<8x32xf32>
    %127 = math.tanh %126 : vector<8x32xf32>
    %128 = arith.mulf %122, %127 : vector<8x32xf32>
    %c0_67 = arith.constant 0 : index
    %c0_68 = arith.constant 0 : index
    %129 = vector.load %arg9[%c0_67, %c0_68] : memref<8x32xf32, #tpu.memory_space<vmem>>, vector<8x32xf32>
    tpu.vector_store %arg9[%c0_67, %c0_68], %126 {strides = array<i32>} : memref<8x32xf32, #tpu.memory_space<vmem>>, vector<8x32xf32>,
    %c0_69 = arith.constant 0 : index
    %c0_70 = arith.constant 0 : index
    %130 = vector.load %arg8[%c0_69, %c0_70] : memref<8x32xf32, #tpu.memory_space<vmem>>, vector<8x32xf32>
    tpu.vector_store %arg8[%c0_69, %c0_70], %128 {strides = array<i32>} : memref<8x32xf32, #tpu.memory_space<vmem>>, vector<8x32xf32>,
    %c0_71 = arith.constant 0 : index
    %131 = arith.index_cast %108 : i32 to index
    %c0_72 = arith.constant 0 : index
    %132 = vector.load %arg6[%c0_71, %131, %c0_72] : memref<1x32x32xf32, #tpu.memory_space<vmem>>, vector<1x8x32xf32>
    %133 = vector.shape_cast %132 : vector<1x8x32xf32> to vector<8x32xf32>
    %134 = vector.shape_cast %128 : vector<8x32xf32> to vector<1x8x32xf32>
    tpu.vector_store %arg6[%c0_71, %131, %c0_72], %134 {strides = array<i32>} : memref<1x32x32xf32, #tpu.memory_space<vmem>>, vector<1x8x32xf32>,
    %c4_i32 = arith.constant 4 : i32
    return
  }
  func.func @transform_0(%arg0: i32, %arg1: i32) -> (i32, i32, i32) {
    %c0_i32 = arith.constant 0 : i32
    %c0_i32_0 = arith.constant 0 : i32
    return %arg0, %arg1, %c0_i32 : i32, i32, i32
  }
  func.func @transform_1(%arg0: i32, %arg1: i32) -> (i32, i32) {
    %c0_i32 = arith.constant 0 : i32
    %c0_i32_0 = arith.constant 0 : i32
    %c0_i32_1 = arith.constant 0 : i32
    return %c0_i32, %c0_i32_0 : i32, i32
  }
  func.func @transform_2(%arg0: i32, %arg1: i32) -> (i32, i32) {
    %c0_i32 = arith.constant 0 : i32
    %c0_i32_0 = arith.constant 0 : i32
    %c0_i32_1 = arith.constant 0 : i32
    return %c0_i32, %c0_i32_0 : i32, i32
  }
  func.func @transform_3(%arg0: i32, %arg1: i32) -> (i32, i32) {
    %c0_i32 = arith.constant 0 : i32
    %c0_i32_0 = arith.constant 0 : i32
    %c0_i32_1 = arith.constant 0 : i32
    return %c0_i32, %c0_i32_0 : i32, i32
  }
  func.func @transform_4(%arg0: i32, %arg1: i32) -> (i32, i32, i32) {
    %c0_i32 = arith.constant 0 : i32
    %c0_i32_0 = arith.constant 0 : i32
    return %arg0, %arg1, %c0_i32 : i32, i32, i32
  }
}

</mosaic_0001>

<llo_original>
// kernel: tpu_custom_call.1
$region0: #{tpu_custom_call.1}
  #allocation0 [shape = 'u32[]', space=smem, size = 0x4, offset = 0x4, fixed_abs, tag = 'smem constant byte address 0x4 - core index']
  #allocation1 [shape = 'u32[72,128]{1,0:T(1,128)}', space=vmem, size = 0x9000, scoped, tag = 'internal scratch']
  #allocation2 [shape = 'f32[32,128]{1,0:T(8,128)}', space=vmem, size = 0x4000, scoped, tag = 'scratch operand']
  #allocation3 [shape = 'f32[8,32]{1,0:T(8,128)}', space=vmem, size = 0x1000, scoped, tag = 'scratch operand']
  #allocation4 [shape = 'f32[8,32]{1,0:T(8,128)}', space=vmem, size = 0x1000, scoped, tag = 'scratch operand']
  %s0 = inlined_call_operand.vmem [shape: f32[2,96,8], index: 0, kind: input, shape index: {}]
  %s1 = inlined_call_operand.vmem [shape: f32[8,128], index: 1, kind: input, shape index: {}]
  %s2 = inlined_call_operand.vmem [shape: f32[32,128], index: 2, kind: input, shape index: {}]
  %s3 = inlined_call_operand.vmem [shape: f32[1,128], index: 3, kind: input, shape index: {}]
  %s4 = inlined_call_operand.vmem [shape: f32[2,96,32], index: 4, kind: output, shape index: {}]
  %s5 = sld [smem:[#allocation0]]
  $region53: #{tpu_custom_call.1} parent=0
    _
  %s7 = ssub.s32 1, %s5
  %s8 = scalar_select 0, %s7, %s5
  loop: start=0, step=1, limit=8
  $region2: #{tpu_custom_call.1} parent=0 // loop_pre_header
    _
  $region3: #{tpu_custom_call.1} parent=0 // loop_header
    %s10 = sphi 0, %s14
    %p11 = scmp.ge.s32.totalorder %s10, 8
    %s17 = sphi 0, %s29
    %s18 = sphi 0, %s25
    %s19 = sphi 0, %s17
    %s20 = sphi 0, %s18
    %s21 = sphi 0, %s19
    %s22 = sphi 0, %s20
    %s34 = sphi 0, %s36
    %s37 = sphi 0, %s34
    %s38 = sphi 0, %s37
    %s54 = sphi 0, %s38
    %s58 = sphi 0, %s58
    %s60 = sphi 0, %s58
    %s61 = sphi 0, %s60
    %s75 = sphi 0, %s61
    %s79 = sphi 0, %s79
    %s81 = sphi 0, %s79
    %s82 = sphi 0, %s81
    %s96 = sphi 0, %s82
    %s100 = sphi 0, %s100
    %s102 = sphi 0, %s100
    %s103 = sphi 0, %s102
    %s117 = sphi 0, %s103
    %s125 = sphi 0, %s127
    %s128 = sphi 0, %s125
    %s129 = sphi 0, %s128
    %s145 = sphi 0, %s129
  $region4: #{tpu_custom_call.1} parent=0 // loop_header_branch
    %13 = sbr.rel (%p11) target = $region8
  $region5: #{tpu_custom_call.1} parent=0 // loop_body
    %s15 = ssub.s32 %s10, 1
    %s16 = ssub.s32 %s10, 2
    %s23 = sadd.s32 1, %s18
    %p24 = scmp.ge.s32.totalorder %s23, 3
    %s25 = scalar_select %p24, 0, %s23
    %s26 = sadd.s32 1, %s17
    %s27 = scalar_select %p24, %s26, %s17
    %p28 = scmp.ge.s32.totalorder %s27, 2
    %s29 = scalar_select %p28, 0, %s27
    %s30 = ssub.s32 %s17, %s29
    %s31 = ssub.s32 %s18, %s25
    %s32 = sor.u32 %s30, %s31
    %p33 = scmp.eq.s32.totalorder %s32, 0
    %s35 = sadd.s32 %s34, 1
    %s36 = scalar_select %p33, %s34, %s35
    %p39 = pneg %p33
    %p40 = scmp.eq.s32.totalorder %s10, 5
    %p41 = por %p39, %p40
    %p42 = scmp.ne.s32.totalorder %s34, %s37
    %p43 = scmp.eq.s32.totalorder %s10, 0
    %p44 = por %p42, %p43
    %p45 = scmp.ne.s32.totalorder %s34, %s37
    %p46 = scmp.eq.s32.totalorder %s15, 5
    %p47 = por %p45, %p46
    %p48 = scmp.ne.s32.totalorder %s37, %s38
    %p49 = scmp.eq.s32.totalorder %s15, 0
    %p50 = por %p48, %p49
    %p51 = scmp.ne.s32.totalorder %s37, %s38
    %p52 = scmp.eq.s32.totalorder %s16, 5
    %p53 = por %p51, %p52
    %p55 = scmp.ne.s32.totalorder %s38, %s54
    %p56 = scmp.eq.s32.totalorder %s16, 0
    %p57 = por %p55, %p56
    %s59 = sadd.s32 %s58, 1
    %p62 = scmp.eq.s32.totalorder %s10, 5
    %p63 = scmp.ne.s32.totalorder %s58, %s60
    %p64 = scmp.eq.s32.totalorder %s10, 0
    %p65 = por %p63, %p64
    %p66 = scmp.ne.s32.totalorder %s58, %s60
    %p67 = scmp.eq.s32.totalorder %s15, 5
    %p68 = por %p66, %p67
    %p69 = scmp.ne.s32.totalorder %s60, %s61
    %p70 = scmp.eq.s32.totalorder %s15, 0
    %p71 = por %p69, %p70
    %p72 = scmp.ne.s32.totalorder %s60, %s61
    %p73 = scmp.eq.s32.totalorder %s16, 5
    %p74 = por %p72, %p73
    %p76 = scmp.ne.s32.totalorder %s61, %s75
    %p77 = scmp.eq.s32.totalorder %s16, 0
    %p78 = por %p76, %p77
    %s80 = sadd.s32 %s79, 1
    %p83 = scmp.eq.s32.totalorder %s10, 5
    %p84 = scmp.ne.s32.totalorder %s79, %s81
    %p85 = scmp.eq.s32.totalorder %s10, 0
    %p86 = por %p84, %p85
    %p87 = scmp.ne.s32.totalorder %s79, %s81
    %p88 = scmp.eq.s32.totalorder %s15, 5
    %p89 = por %p87, %p88
    %p90 = scmp.ne.s32.totalorder %s81, %s82
    %p91 = scmp.eq.s32.totalorder %s15, 0
    %p92 = por %p90, %p91
    %p93 = scmp.ne.s32.totalorder %s81, %s82
    %p94 = scmp.eq.s32.totalorder %s16, 5
    %p95 = por %p93, %p94
    %p97 = scmp.ne.s32.totalorder %s82, %s96
    %p98 = scmp.eq.s32.totalorder %s16, 0
    %p99 = por %p97, %p98
    %s101 = sadd.s32 %s100, 1
    %p104 = scmp.eq.s32.totalorder %s10, 5
    %p105 = scmp.ne.s32.totalorder %s100, %s102
    %p106 = scmp.eq.s32.totalorder %s10, 0
    %p107 = por %p105, %p106
    %p108 = scmp.ne.s32.totalorder %s100, %s102
    %p109 = scmp.eq.s32.totalorder %s15, 5
    %p110 = por %p108, %p109
    %p111 = scmp.ne.s32.totalorder %s102, %s103
    %p112 = scmp.eq.s32.totalorder %s15, 0
    %p113 = por %p111, %p112
    %p114 = scmp.ne.s32.totalorder %s102, %s103
    %p115 = scmp.eq.s32.totalorder %s16, 5
    %p116 = por %p114, %p115
    %p118 = scmp.ne.s32.totalorder %s103, %s117
    %p119 = scmp.eq.s32.totalorder %s16, 0
    %p120 = por %p118, %p119
    %s121 = ssub.s32 %s17, %s29
    %s122 = ssub.s32 %s18, %s25
    %s123 = sor.u32 %s121, %s122
    %p124 = scmp.eq.s32.totalorder %s123, 0
    %s126 = sadd.s32 %s125, 1
    %s127 = scalar_select %p124, %s125, %s126
    %p130 = pneg %p124
    %p131 = scmp.eq.s32.totalorder %s10, 5
    %p132 = por %p130, %p131
    %p133 = scmp.ne.s32.totalorder %s125, %s128
    %p134 = scmp.eq.s32.totalorder %s10, 0
    %p135 = por %p133, %p134
    %p136 = scmp.ne.s32.totalorder %s125, %s128
    %p137 = scmp.eq.s32.totalorder %s15, 5
    %p138 = por %p136, %p137
    %p139 = scmp.ne.s32.totalorder %s128, %s129
    %p140 = scmp.eq.s32.totalorder %s15, 0
    %p141 = por %p139, %p140
    %p142 = scmp.ne.s32.totalorder %s128, %s129
    %p143 = scmp.eq.s32.totalorder %s16, 5
    %p144 = por %p142, %p143
    %p146 = scmp.ne.s32.totalorder %s129, %s145
    %p147 = scmp.eq.s32.totalorder %s16, 0
    %p148 = por %p146, %p147
    %p149 = scmp.le.s32.totalorder 1, %s10
    %p150 = scmp.lt.s32.totalorder %s10, 7
    %p151 = pnand %p149, %p150
    %p152 = pneg %p151
    // Predicated region
    $region9: #{tpu_custom_call.1} parent=5 // pred_check
      _
    $region10: #{tpu_custom_call.1} parent=5 // pred_check_branch
      %154 = sbr.rel (%p151) target = $region12
    $region11: #{tpu_custom_call.1} parent=5 // pred_region
      %s155 = ssub.s32 %s10, 1
      // Predicated region
      $region13: #{tpu_custom_call.1} parent=11 // pred_check
        %p156 = pneg %p71
      $region14: #{tpu_custom_call.1} parent=11 // pred_check_branch
        %158 = sbr.rel (%p156) target = $region16
      $region15: #{tpu_custom_call.1} parent=11 // pred_region
        _
      $region16: #{tpu_custom_call.1} parent=11 // pred_fallthru
        _
      // Predicated region
      $region17: #{tpu_custom_call.1} parent=11 // pred_check
        %p159 = pneg %p92
      $region18: #{tpu_custom_call.1} parent=11 // pred_check_branch
        %161 = sbr.rel (%p159) target = $region20
      $region19: #{tpu_custom_call.1} parent=11 // pred_region
        _
      $region20: #{tpu_custom_call.1} parent=11 // pred_fallthru
        _
      // Predicated region
      $region21: #{tpu_custom_call.1} parent=11 // pred_check
        %p162 = pneg %p113
      $region22: #{tpu_custom_call.1} parent=11 // pred_check_branch
        %164 = sbr.rel (%p162) target = $region24
      $region23: #{tpu_custom_call.1} parent=11 // pred_region
        _
      $region24: #{tpu_custom_call.1} parent=11 // pred_fallthru
        _
    $region12: #{tpu_custom_call.1} parent=5 // pred_fallthru
      _
    %p165 = scmp.lt.s32.totalorder %s10, 6
    // Predicated region
    $region25: #{tpu_custom_call.1} parent=5 // pred_check
      %p166 = pneg %p165
    $region26: #{tpu_custom_call.1} parent=5 // pred_check_branch
      %168 = sbr.rel (%p166) target = $region28
    $region27: #{tpu_custom_call.1} parent=5 // pred_region
      // Predicated region
      $region29: #{tpu_custom_call.1} parent=27 // pred_check
        %p169 = pneg %p44
      $region30: #{tpu_custom_call.1} parent=27 // pred_check_branch
        %171 = sbr.rel (%p169) target = $region32
      $region31: #{tpu_custom_call.1} parent=27 // pred_region
        %s172 = smul.u32 4, %s18
        %p173 = scmp.lt.s32.totalorder %s17, 1
        %s174 = scalar_select %p173, %s17, 1
        %p175 = scmp.lt.s32.totalorder %s172, 11
        %s176 = scalar_select %p175, %s172, 11
        %s177 = smul.addr %s174, 12
        %s178 = sadd.s32 %s176, %s177
        %s179 = smul.addr %s178, 8
        %s180 = scalar_lea.vmem %s0, %s179
        %s181 = smul.u32 4, %s18
      $region32: #{tpu_custom_call.1} parent=27 // pred_fallthru
        _
    $region28: #{tpu_custom_call.1} parent=5 // pred_fallthru
      _
    %p182 = scmp.le.s32.totalorder 1, %s10
    %p183 = scmp.lt.s32.totalorder %s10, 7
    %p184 = pnand %p182, %p183
    %p185 = pneg %p184
    // Predicated region
    $region33: #{tpu_custom_call.1} parent=5 // pred_check
      _
    $region34: #{tpu_custom_call.1} parent=5 // pred_check_branch
      %187 = sbr.rel (%p184) target = $region36
    $region35: #{tpu_custom_call.1} parent=5 // pred_region
      %s188 = ssub.s32 %s10, 1
      %s189 = smul.u32 4, %s20
      %p190 = scmp.lt.s32.totalorder %s19, 1
      %s191 = scalar_select %p190, %s19, 1
      %p192 = scmp.lt.s32.totalorder %s189, 11
      %s193 = scalar_select %p192, %s189, 11
      %s194 = smul.addr %s191, 12
      %s195 = sadd.s32 %s193, %s194
      %s196 = smul.addr %s195, 8
      %s197 = scalar_lea.vmem %s0, %s196
      %p198 = pneg %p50
      %p199 = pneg %p47
      %p200 = pneg %p71
      %p201 = pneg %p68
      %p202 = pneg %p92
      %p203 = pneg %p89
      %p204 = pneg %p113
      %p205 = pneg %p110
      %p206 = pneg %p141
      %p207 = pneg %p138
      %s208 = smul.u32 4, %s20
      %p209 = scmp.lt.s32.totalorder %s19, 1
      %s210 = scalar_select %p209, %s19, 1
      %p211 = scmp.lt.s32.totalorder %s208, 11
      %s212 = scalar_select %p211, %s208, 11
      %s213 = smul.addr %s210, 12
      %s214 = sadd.s32 %s212, %s213
      %s215 = smul.addr %s214, 8
      %s216 = scalar_lea.vmem %s4, %s215
      %s217 = smul.u32 4, %s20
      %p218 = scmp.lt.s32.totalorder %s19, 1
      %s219 = scalar_select %p218, %s19, 1
      %p220 = scmp.lt.s32.totalorder %s217, 11
      %s221 = scalar_select %p220, %s217, 11
      %s222 = smul.addr %s219, 12
      %s223 = sadd.s32 %s221, %s222
      %s224 = smul.addr %s223, 8
      %s225 = scalar_lea.vmem %s0, %s224
      %s226 = smul.u32 4, %s20
      %s227 = smul.u32 4, %s20
      %p228 = scmp.lt.s32.totalorder %s19, 1
      %s229 = scalar_select %p228, %s19, 1
      %p230 = scmp.lt.s32.totalorder %s227, 11
      %s231 = scalar_select %p230, %s227, 11
      %s232 = smul.addr %s229, 12
      %s233 = sadd.s32 %s231, %s232
      %s234 = smul.addr %s233, 8
      %s235 = scalar_lea.vmem %s4, %s234
      %s236 = smul.u32 4, %s20
      %v237 = vld [vmem:[%s225] sm:$0xff]
      %v238 = vld [vmem:[%s225 + $0x8] sm:$0xff]
      %v239 = vld [vmem:[%s225 + $0x10] sm:$0xff]
      %v240 = vld [vmem:[%s225 + $0x18] sm:$0xff]
      %v241 = vld [vmem:[%s1] sm:$0xff]
      %v242 = vld [vmem:[%s3] sm:$0x1]
      %v244 = vperm.slane %v242, 0
      %vm246 = vcmask 64512
      %v248 = vsel %vm246, %v237, 0
      %v251 = vsel %vm246, %v238, 0
      %v254 = vsel %vm246, %v239, 0
      %v257 = vsel %vm246, %v240, 0
      %259 = vmatpush.msra.mxu0 0.0
      %260 = vmatpush.msra.mxu0 0.0
      %261 = vmatpush.msra.mxu0 0.0
      %262 = vmatpush.msra.mxu0 0.0
      %263 = vmatpush.msra.mxu0 0.0
      %264 = vmatpush.msra.mxu0 0.0
      %265 = vmatpush.msra.mxu0 0.0
      %266 = vmatpush.msra.mxu0 0.0
      %267 = vmatpush.msra.mxu0 0.0
      %268 = vmatpush.msra.mxu0 0.0
      %269 = vmatpush.msra.mxu0 0.0
      %270 = vmatpush.msra.mxu0 0.0
      %271 = vmatpush.msra.mxu0 0.0
      %272 = vmatpush.msra.mxu0 0.0
      %273 = vmatpush.msra.mxu0 0.0
      %274 = vmatpush.msra.mxu0 %v241
      %275 = vmatmul.f32.gmra.mxu0 %v248
      %v276 = vpop.f32.mrf.mxu0
      %v277 = vadd.f32 %v244, %v276
      %278 = vmatmul.f32.gmra.mxu0 %v251
      %v279 = vpop.f32.mrf.mxu0
      %v280 = vadd.f32 %v244, %v279
      %281 = vmatmul.f32.gmra.mxu0 %v254
      %v282 = vpop.f32.mrf.mxu0
      %v283 = vadd.f32 %v244, %v282
      %284 = vmatmul.f32.gmra.mxu0 %v257
      %v285 = vpop.f32.mrf.mxu0
      %v286 = vadd.f32 %v244, %v285
      %287 = vdwg.mxu0
      %288 = vst [vmem:[#allocation2] sm:$0xff] %v277
      %289 = vst [vmem:[#allocation2 + $0x8] sm:$0xff] %v280
      %290 = vst [vmem:[#allocation2 + $0x10] sm:$0xff] %v283
      %291 = vst [vmem:[#allocation2 + $0x18] sm:$0xff] %v286
      %p292 = scmp.eq.s32.totalorder %s20, 0
      // Predicated region
      $region37: #{tpu_custom_call.1} parent=35 // pred_check
        %p293 = pneg %p292
      $region38: #{tpu_custom_call.1} parent=35 // pred_check_branch
        %295 = sbr.rel (%p293) target = $region40
      $region39: #{tpu_custom_call.1} parent=35 // pred_region
        %vm296 = vcmask 261120
        %297 = vst.msk [vmem:[#allocation3] sm:$0xff] %vm296, 0.0
        %298 = vst.msk [vmem:[#allocation4] sm:$0xff] %vm296, 0.0
      $region40: #{tpu_custom_call.1} parent=35 // pred_fallthru
        _
      %v299 = vlaneseq
      %v300 = vand.u32 %v299, 127
      %vm301 = vcmp.ge.s32.totalorder %v300, 64
      %vm302 = vcmp.lt.s32.totalorder %v300, 96
      %vm303 = vmand %vm301, %vm302
      %v304 = vsel %vm303, 1.0, 0.5
      %v305 = vsel %vm303, 0.0, 0.5
      %v306 = vld [vmem:[#allocation2] sm:$0xff]
      %v307 = vld [vmem:[#allocation3] sm:$0xff]
      %v308 = vld [vmem:[%s2] sm:$0xff]
      %v309 = vld [vmem:[%s2 + $0x8] sm:$0xff]
      %v310 = vld [vmem:[%s2 + $0x10] sm:$0xff]
      %v311 = vld [vmem:[%s2 + $0x18] sm:$0xff]
      %vm312 = vcmask 261120
      %v314 = vsel %vm312, %v307, 0
      %316 = vmatpush.msra.mxu0 0.0
      %317 = vmatpush.msra.mxu0 0.0
      %318 = vmatpush.msra.mxu0 0.0
      %319 = vmatpush.msra.mxu0 0.0
      %320 = vmatpush.msra.mxu0 0.0
      %321 = vmatpush.msra.mxu0 0.0
      %322 = vmatpush.msra.mxu0 0.0
      %323 = vmatpush.msra.mxu0 0.0
      %324 = vmatpush.msra.mxu0 0.0
      %325 = vmatpush.msra.mxu0 0.0
      %326 = vmatpush.msra.mxu0 0.0
      %327 = vmatpush.msra.mxu0 0.0
      %328 = vmatpush.msra.mxu0 %v311
      %329 = vmatpush.msra.mxu0 %v310
      %330 = vmatpush.msra.mxu0 %v309
      %331 = vmatpush.msra.mxu0 %v308
      %332 = vmatmul.f32.gmra.mxu0 %v314
      %v333 = vpop.f32.mrf.mxu0
      %v334 = vadd.f32 0.0, %v333
      %335 = vdwg.mxu0
      %v336 = vadd.f32 %v306, %v334
      %v337 = vmul.f32 %v304, %v336
      %v338 = vtanh.pop %v337
      %v339 = vmul.f32 %v304, %v338
      %v340 = vadd.f32 %v339, %v305
      %v341 = vld [vmem:[#allocation4] sm:$0xff]
      %343 = vrot.lane.b32.xlu0 %v341, 32
      %v344 = vpop.permute.xlu0 %343
      %v346 = vmul.f32 %v340, %v344
      %348 = vrot.lane.b32.xlu0 %v340, 64
      %v349 = vpop.permute.xlu0 %348
      %v351 = vmul.f32 %v340, %v349
      %353 = vrot.lane.b32.xlu0 %v351, 32
      %v354 = vpop.permute.xlu0 %353
      %v356 = vadd.f32 %v346, %v354
      %v357 = vtanh.pop %v356
      %359 = vrot.lane.b32.xlu0 %v357, 64
      %v360 = vpop.permute.xlu0 %359
      %v362 = vmul.f32 %v340, %v360
      %364 = vrot.lane.b32.xlu0 %v356, 96
      %v365 = vpop.permute.xlu0 %364
      %367 = vst.msk [vmem:[#allocation4] sm:$0xff] %vm312, %v365
      %369 = vrot.lane.b32.xlu0 %v362, 32
      %v370 = vpop.permute.xlu0 %369
      %372 = vst.msk [vmem:[#allocation3] sm:$0xff] %vm312, %v370
      %373 = vst.msk [vmem:[%s235] sm:$0xff] %vm312, %v370
      %s374 = scalar_lea.vmem [#allocation2], 8
      %v375 = vld [vmem:[%s374] sm:$0xff]
      %v376 = vld [vmem:[#allocation3] sm:$0xff]
      %v377 = vld [vmem:[%s2] sm:$0xff]
      %v378 = vld [vmem:[%s2 + $0x8] sm:$0xff]
      %v379 = vld [vmem:[%s2 + $0x10] sm:$0xff]
      %v380 = vld [vmem:[%s2 + $0x18] sm:$0xff]
      %v382 = vsel %vm312, %v376, 0
      %384 = vmatpush.msra.mxu0 0.0
      %385 = vmatpush.msra.mxu0 0.0
      %386 = vmatpush.msra.mxu0 0.0
      %387 = vmatpush.msra.mxu0 0.0
      %388 = vmatpush.msra.mxu0 0.0
      %389 = vmatpush.msra.mxu0 0.0
      %390 = vmatpush.msra.mxu0 0.0
      %391 = vmatpush.msra.mxu0 0.0
      %392 = vmatpush.msra.mxu0 0.0
      %393 = vmatpush.msra.mxu0 0.0
      %394 = vmatpush.msra.mxu0 0.0
      %395 = vmatpush.msra.mxu0 0.0
      %396 = vmatpush.msra.mxu0 %v380
      %397 = vmatpush.msra.mxu0 %v379
      %398 = vmatpush.msra.mxu0 %v378
      %399 = vmatpush.msra.mxu0 %v377
      %400 = vmatmul.f32.gmra.mxu0 %v382
      %v401 = vpop.f32.mrf.mxu0
      %v402 = vadd.f32 0.0, %v401
      %403 = vdwg.mxu0
      %v404 = vadd.f32 %v375, %v402
      %v405 = vmul.f32 %v304, %v404
      %v406 = vtanh.pop %v405
      %v407 = vmul.f32 %v304, %v406
      %v408 = vadd.f32 %v407, %v305
      %v409 = vld [vmem:[#allocation4] sm:$0xff]
      %411 = vrot.lane.b32.xlu0 %v409, 32
      %v412 = vpop.permute.xlu0 %411
      %v414 = vmul.f32 %v408, %v412
      %416 = vrot.lane.b32.xlu0 %v408, 64
      %v417 = vpop.permute.xlu0 %416
      %v419 = vmul.f32 %v408, %v417
      %421 = vrot.lane.b32.xlu0 %v419, 32
      %v422 = vpop.permute.xlu0 %421
      %v424 = vadd.f32 %v414, %v422
      %v425 = vtanh.pop %v424
      %427 = vrot.lane.b32.xlu0 %v425, 64
      %v428 = vpop.permute.xlu0 %427
      %v430 = vmul.f32 %v408, %v428
      %432 = vrot.lane.b32.xlu0 %v424, 96
      %v433 = vpop.permute.xlu0 %432
      %435 = vst.msk [vmem:[#allocation4] sm:$0xff] %vm312, %v433
      %437 = vrot.lane.b32.xlu0 %v430, 32
      %v438 = vpop.permute.xlu0 %437
      %440 = vst.msk [vmem:[#allocation3] sm:$0xff] %vm312, %v438
      %s441 = scalar_lea.vmem %s235, 8
      %442 = vst.msk [vmem:[%s441] sm:$0xff] %vm312, %v438
      %s443 = scalar_lea.vmem [#allocation2], 16
      %v444 = vld [vmem:[%s443] sm:$0xff]
      %v445 = vld [vmem:[#allocation3] sm:$0xff]
      %v446 = vld [vmem:[%s2] sm:$0xff]
      %v447 = vld [vmem:[%s2 + $0x8] sm:$0xff]
      %v448 = vld [vmem:[%s2 + $0x10] sm:$0xff]
      %v449 = vld [vmem:[%s2 + $0x18] sm:$0xff]
      %v451 = vsel %vm312, %v445, 0
      %453 = vmatpush.msra.mxu0 0.0
      %454 = vmatpush.msra.mxu0 0.0
      %455 = vmatpush.msra.mxu0 0.0
      %456 = vmatpush.msra.mxu0 0.0
      %457 = vmatpush.msra.mxu0 0.0
      %458 = vmatpush.msra.mxu0 0.0
      %459 = vmatpush.msra.mxu0 0.0
      %460 = vmatpush.msra.mxu0 0.0
      %461 = vmatpush.msra.mxu0 0.0
      %462 = vmatpush.msra.mxu0 0.0
      %463 = vmatpush.msra.mxu0 0.0
      %464 = vmatpush.msra.mxu0 0.0
      %465 = vmatpush.msra.mxu0 %v449
      %466 = vmatpush.msra.mxu0 %v448
      %467 = vmatpush.msra.mxu0 %v447
      %468 = vmatpush.msra.mxu0 %v446
      %469 = vmatmul.f32.gmra.mxu0 %v451
      %v470 = vpop.f32.mrf.mxu0
      %v471 = vadd.f32 0.0, %v470
      %472 = vdwg.mxu0
      %v473 = vadd.f32 %v444, %v471
      %v474 = vmul.f32 %v304, %v473
      %v475 = vtanh.pop %v474
      %v476 = vmul.f32 %v304, %v475
      %v477 = vadd.f32 %v476, %v305
      %v478 = vld [vmem:[#allocation4] sm:$0xff]
      %480 = vrot.lane.b32.xlu0 %v478, 32
      %v481 = vpop.permute.xlu0 %480
      %v483 = vmul.f32 %v477, %v481
      %485 = vrot.lane.b32.xlu0 %v477, 64
      %v486 = vpop.permute.xlu0 %485
      %v488 = vmul.f32 %v477, %v486
      %490 = vrot.lane.b32.xlu0 %v488, 32
      %v491 = vpop.permute.xlu0 %490
      %v493 = vadd.f32 %v483, %v491
      %v494 = vtanh.pop %v493
      %496 = vrot.lane.b32.xlu0 %v494, 64
      %v497 = vpop.permute.xlu0 %496
      %v499 = vmul.f32 %v477, %v497
      %501 = vrot.lane.b32.xlu0 %v493, 96
      %v502 = vpop.permute.xlu0 %501
      %504 = vst.msk [vmem:[#allocation4] sm:$0xff] %vm312, %v502
      %506 = vrot.lane.b32.xlu0 %v499, 32
      %v507 = vpop.permute.xlu0 %506
      %509 = vst.msk [vmem:[#allocation3] sm:$0xff] %vm312, %v507
      %s510 = scalar_lea.vmem %s235, 16
      %511 = vst.msk [vmem:[%s510] sm:$0xff] %vm312, %v507
      %s512 = scalar_lea.vmem [#allocation2], 24
      %v513 = vld [vmem:[%s512] sm:$0xff]
      %v514 = vld [vmem:[#allocation3] sm:$0xff]
      %v515 = vld [vmem:[%s2] sm:$0xff]
      %v516 = vld [vmem:[%s2 + $0x8] sm:$0xff]
      %v517 = vld [vmem:[%s2 + $0x10] sm:$0xff]
      %v518 = vld [vmem:[%s2 + $0x18] sm:$0xff]
      %v520 = vsel %vm312, %v514, 0
      %522 = vmatpush.msra.mxu0 0.0
      %523 = vmatpush.msra.mxu0 0.0
      %524 = vmatpush.msra.mxu0 0.0
      %525 = vmatpush.msra.mxu0 0.0
      %526 = vmatpush.msra.mxu0 0.0
      %527 = vmatpush.msra.mxu0 0.0
      %528 = vmatpush.msra.mxu0 0.0
      %529 = vmatpush.msra.mxu0 0.0
      %530 = vmatpush.msra.mxu0 0.0
      %531 = vmatpush.msra.mxu0 0.0
      %532 = vmatpush.msra.mxu0 0.0
      %533 = vmatpush.msra.mxu0 0.0
      %534 = vmatpush.msra.mxu0 %v518
      %535 = vmatpush.msra.mxu0 %v517
      %536 = vmatpush.msra.mxu0 %v516
      %537 = vmatpush.msra.mxu0 %v515
      %538 = vmatmul.f32.gmra.mxu0 %v520
      %v539 = vpop.f32.mrf.mxu0
      %v540 = vadd.f32 0.0, %v539
      %541 = vdwg.mxu0
      %v542 = vadd.f32 %v513, %v540
      %v543 = vmul.f32 %v304, %v542
      %v544 = vtanh.pop %v543
      %v545 = vmul.f32 %v304, %v544
      %v546 = vadd.f32 %v545, %v305
      %v547 = vld [vmem:[#allocation4] sm:$0xff]
      %549 = vrot.lane.b32.xlu0 %v547, 32
      %v550 = vpop.permute.xlu0 %549
      %v552 = vmul.f32 %v546, %v550
      %554 = vrot.lane.b32.xlu0 %v546, 64
      %v555 = vpop.permute.xlu0 %554
      %v557 = vmul.f32 %v546, %v555
      %559 = vrot.lane.b32.xlu0 %v557, 32
      %v560 = vpop.permute.xlu0 %559
      %v562 = vadd.f32 %v552, %v560
      %v563 = vtanh.pop %v562
      %565 = vrot.lane.b32.xlu0 %v563, 64
      %v566 = vpop.permute.xlu0 %565
      %v568 = vmul.f32 %v546, %v566
      %570 = vrot.lane.b32.xlu0 %v562, 96
      %v571 = vpop.permute.xlu0 %570
      %573 = vst.msk [vmem:[#allocation4] sm:$0xff] %vm312, %v571
      %575 = vrot.lane.b32.xlu0 %v568, 32
      %v576 = vpop.permute.xlu0 %575
      %578 = vst.msk [vmem:[#allocation3] sm:$0xff] %vm312, %v576
      %s579 = scalar_lea.vmem %s235, 24
      %580 = vst.msk [vmem:[%s579] sm:$0xff] %vm312, %v576
      %s581 = smul.u32 4, %s20
      %p582 = scmp.lt.s32.totalorder %s19, 1
      %s583 = scalar_select %p582, %s19, 1
      %p584 = scmp.lt.s32.totalorder %s581, 11
      %s585 = scalar_select %p584, %s581, 11
      %s586 = smul.addr %s583, 12
      %s587 = sadd.s32 %s585, %s586
      %s588 = smul.addr %s587, 8
      %s589 = scalar_lea.vmem %s4, %s588
      // Predicated region
      $region41: #{tpu_custom_call.1} parent=35 // pred_check
        %p590 = pneg %p138
      $region42: #{tpu_custom_call.1} parent=35 // pred_check_branch
        %592 = sbr.rel (%p590) target = $region44
      $region43: #{tpu_custom_call.1} parent=35 // pred_region
        %s593 = smul.u32 4, %s20
      $region44: #{tpu_custom_call.1} parent=35 // pred_fallthru
        _
    $region36: #{tpu_custom_call.1} parent=5 // pred_fallthru
      _
    %p594 = scmp.le.s32.totalorder 2, %s10
    // Predicated region
    $region45: #{tpu_custom_call.1} parent=5 // pred_check
      %p595 = pneg %p594
    $region46: #{tpu_custom_call.1} parent=5 // pred_check_branch
      %597 = sbr.rel (%p595) target = $region48
    $region47: #{tpu_custom_call.1} parent=5 // pred_region
      %s598 = ssub.s32 %s10, 2
      // Predicated region
      $region49: #{tpu_custom_call.1} parent=47 // pred_check
        %p599 = pneg %p144
      $region50: #{tpu_custom_call.1} parent=47 // pred_check_branch
        %601 = sbr.rel (%p599) target = $region52
      $region51: #{tpu_custom_call.1} parent=47 // pred_region
        %s602 = smul.u32 4, %s22
        %p603 = scmp.lt.s32.totalorder %s21, 1
        %s604 = scalar_select %p603, %s21, 1
        %p605 = scmp.lt.s32.totalorder %s602, 11
        %s606 = scalar_select %p605, %s602, 11
        %s607 = smul.addr %s604, 12
        %s608 = sadd.s32 %s606, %s607
        %s609 = smul.addr %s608, 8
        %s610 = scalar_lea.vmem %s4, %s609
      $region52: #{tpu_custom_call.1} parent=47 // pred_fallthru
        _
    $region48: #{tpu_custom_call.1} parent=5 // pred_fallthru
      _
  $region6: #{tpu_custom_call.1} parent=0 // loop_footer
    %s14 = sadd.s32 1, %s10
  $region7: #{tpu_custom_call.1} parent=0 // loop_footer_branch
    %9 = sbr.rel target = $region3
  $region8: #{tpu_custom_call.1} parent=0 // loop_exit
    _

</llo_original>
